<compile_context>
chip_gen: v6e
topology: v6e:2x2x1
jax: 0.10.0
libtpu: 0.0.40
codegen_flags: <defaults>
</compile_context>

<pallas_src>
import functools

import jax
import jax.numpy as jnp
import numpy as np
from jax.experimental import pallas as pl
from jax.experimental.pallas import tpu as pltpu

_LANES = 128
# Total VMEM pipeline budget: 4 streams (hidden-in, value-in, new-hidden-out,
# avg-out) x 2-deep double buffering.  16 MiB fits comfortably on v5e/v6e
# (128 MiB physical) and v7x (64 MiB physical).
_VMEM_PIPE_BUDGET = 16 * 1024 * 1024
_MIN_GRID_STEPS = 4                      # give v7x's two TensorCores >= 2 steps each
_VMEM_LIMIT_BYTES = 32 * 1024 * 1024     # explicit (v5e default scoped limit is 16 MiB)


def _native_sublanes(*dtypes):
    """Native sublane tile: 8 for 32-bit, 16 for bf16, 32 for int8/fp8."""
    sub = 8
    for dt in dtypes:
        sub = max(sub, 32 // jnp.dtype(dt).itemsize)
    return sub


def _choose_tile_rows(rows, state_dtype, value_dtype):
    sub = _native_sublanes(state_dtype, value_dtype)
    s_it = jnp.dtype(state_dtype).itemsize
    v_it = jnp.dtype(value_dtype).itemsize
    # Bytes per tile row across all double-buffered streams.
    bytes_per_row = 2 * _LANES * (3 * s_it + v_it)
    by_vmem = _VMEM_PIPE_BUDGET // bytes_per_row        # ~4096 rows for f32
    by_grid = -(-rows // _MIN_GRID_STEPS)               # keep >= 4 grid steps
    tile = min(by_vmem, by_grid)
    tile = max(sub, (tile // sub) * sub)                # dtype-native sublane multiple
    return tile


def _ema_kernel(inv_bias_ref, hidden_ref, value_ref, new_hidden_ref, avg_ref,
                *, one_minus_decay):
    # inv_bias_ref: SMEM (1,) f32 = 1 / (1 - decay**counter)
    inv_bias = inv_bias_ref[0]
    h = hidden_ref[...].astype(jnp.float32)
    v = value_ref[...].astype(jnp.float32)
    new_h = h - (h - v) * one_minus_decay                # VPU elementwise, f32
    new_hidden_ref[...] = new_h.astype(new_hidden_ref.dtype)
    avg_ref[...] = (new_h * inv_bias).astype(avg_ref.dtype)


@functools.partial(
    jax.jit,
    static_argnames=("decay", "orig_shape"),
    donate_argnums=(0,),
)
def _ema_step(hidden2d, value, counter, *, decay, orig_shape):
    """One EMA step.

    hidden2d : (rows, 128) persistent lane-dense state (donated, aliased in-place).
    value    : array of shape `orig_shape`, any float dtype (cast in-kernel).
    counter  : traced int32 step counter (>= 1).
    Returns (new_hidden2d, average) with average shaped like `orig_shape`.
    """
    n = int(np.prod(orig_shape)) if orig_shape else 1
    rows, lanes = hidden2d.shape
    state_dtype = hidden2d.dtype
    padded_n = rows * lanes

    # Lay value out to match the state layout.  For n % 128 == 0 this is a
    # free reshape; only truly unaligned shapes materialize a one-off pad.
    v_flat = value.reshape(-1)
    if padded_n != n:
        v_flat = jnp.pad(v_flat, (0, padded_n - n))
    v2 = v_flat.reshape(rows, lanes)

    # Bias correction scale, computed as -1/expm1(counter*log(decay)) for
    # better accuracy than 1/(1 - decay**counter) when decay is close to 1.
    log_decay = jnp.log(jnp.float32(decay))
    bias = -jnp.expm1(counter.astype(jnp.float32) * log_decay)
    inv_bias = (jnp.float32(1.0) / bias).reshape(1)

    tile_rows = _choose_tile_rows(rows, state_dtype, v2.dtype)
    grid = ((rows + tile_rows - 1) // tile_rows,)

    kernel = functools.partial(_ema_kernel, one_minus_decay=float(1.0 - decay))

    # NOTE: operand order is (inv_bias, hidden, value).  The alias below maps
    # operand 1 (hidden) onto output 0 (new hidden); keep them in sync if the
    # operand order ever changes.
    new_h2, avg2 = pl.pallas_call(
        kernel,
        out_shape=(
            jax.ShapeDtypeStruct((rows, lanes), state_dtype),   # new hidden (aliased)
            jax.ShapeDtypeStruct((rows, lanes), state_dtype),   # average
        ),
        grid=grid,
        in_specs=[
            pl.BlockSpec(memory_space=pltpu.MemorySpace.SMEM),      # inv_bias scalar
            pl.BlockSpec((tile_rows, lanes), lambda i: (i, 0)),     # hidden
            pl.BlockSpec((tile_rows, lanes), lambda i: (i, 0)),     # value
        ],
        out_specs=(
            pl.BlockSpec((tile_rows, lanes), lambda i: (i, 0)),     # new hidden
            pl.BlockSpec((tile_rows, lanes), lambda i: (i, 0)),     # average
        ),
        input_output_aliases={1: 0},   # hidden input -> new-hidden output (in-place)
        compiler_params=pltpu.CompilerParams(
            dimension_semantics=("parallel",),
            vmem_limit_bytes=_VMEM_LIMIT_BYTES,
        ),
    )(inv_bias, hidden2d, v2)

    avg_flat = avg2.reshape(-1)
    if padded_n != n:
        avg_flat = avg_flat[:n]
    average = avg_flat.reshape(orig_shape)
    return new_h2, average


class ExponentialMovingAverage:
    """JAX/Pallas port of the stateful PyTorch module (hidden buffer + counter)."""

    def __init__(self, init_value, decay):
        init_value = jnp.asarray(init_value)
        self.decay = float(decay)
        self.counter = 0
        self.shape = tuple(init_value.shape)
        self.dtype = init_value.dtype
        n = int(np.prod(self.shape)) if self.shape else 1
        self._n = n
        if n % _LANES == 0:
            # Aligned: state is exactly n elements; ragged last grid block (if
            # rows isn't a tile multiple) is handled by Pallas, so no pad or
            # slice is ever materialized in the hot path.
            rows = n // _LANES
        else:
            # Unaligned tail: pad once to a dtype-native (sub, 128) multiple.
            chunk = _native_sublanes(self.dtype) * _LANES
            rows = ((-(-n // chunk)) * chunk) // _LANES
        self._rows = rows
        # Persistent lane-dense state, original dtype (matches PyTorch buffer).
        self.hidden2d = jnp.zeros((rows, _LANES), dtype=self.dtype)

    @property
    def hidden(self):
        flat = self.hidden2d.reshape(-1)
        if self._rows * _LANES != self._n:
            flat = flat[: self._n]
        return flat.reshape(self.shape)

    def __call__(self, value):
        self.counter += 1
        new_hidden2d, average = _ema_step(
            self.hidden2d,
            value,
            jnp.int32(self.counter),
            decay=self.decay,
            orig_shape=self.shape,
        )
        self.hidden2d = new_hidden2d
        return average


def _reference_step(hidden, value, decay, counter):
    new_hidden = hidden - (hidden - value) * (1.0 - decay)
    average = new_hidden / (1.0 - decay ** counter)
    return new_hidden, average


if __name__ == "__main__":
    key = jax.random.PRNGKey(0)
    decay = 0.99
    k1, k2, k3, k4 = jax.random.split(key, 4)

    # --- main test: (B, C, H, W) = (2, 4, 16, 16), two stateful steps ------
    B, C, H, W = 2, 4, 16, 16
    ema = ExponentialMovingAverage(jnp.zeros((B, C, H, W), jnp.float32), decay)
    v1 = jax.random.normal(k1, (B, C, H, W), dtype=jnp.float32)
    v2 = jax.random.normal(k2, (B, C, H, W), dtype=jnp.float32)
    avg1 = ema(v1)
    avg2 = ema(v2)
    jax.block_until_ready(avg2)

    h_ref = jnp.zeros((B, C, H, W), jnp.float32)
    h_ref, a1_ref = _reference_step(h_ref, v1, decay, 1)
    h_ref, a2_ref = _reference_step(h_ref, v2, decay, 2)
    np.testing.assert_allclose(np.asarray(avg1), np.asarray(a1_ref), rtol=1e-5, atol=1e-5)
    np.testing.assert_allclose(np.asarray(avg2), np.asarray(a2_ref), rtol=1e-5, atol=1e-5)
    np.testing.assert_allclose(np.asarray(ema.hidden), np.asarray(h_ref), rtol=1e-5, atol=1e-5)

    # --- ragged-last-block path: rows (20) not a multiple of tile_rows (8) --
    ema_r = ExponentialMovingAverage(jnp.zeros((20, 128), jnp.float32), decay)
    vr = jax.random.normal(k3, (20, 128), dtype=jnp.float32)
    avg_r = ema_r(vr)
    _, ar_ref = _reference_step(jnp.zeros((20, 128), jnp.float32), vr, decay, 1)
    np.testing.assert_allclose(np.asarray(avg_r), np.asarray(ar_ref), rtol=1e-5, atol=1e-5)

    # --- unaligned (n % 128 != 0) fallback: one-off pad/slice --------------
    ema_u = ExponentialMovingAverage(jnp.zeros((5, 77), jnp.float32), decay)
    vu = jax.random.normal(k4, (5, 77), dtype=jnp.float32)
    avg_u = ema_u(vu)
    _, au_ref = _reference_step(jnp.zeros((5, 77), jnp.float32), vu, decay, 1)
    np.testing.assert_allclose(np.asarray(avg_u), np.asarray(au_ref), rtol=1e-5, atol=1e-5)

    jax.block_until_ready((avg_r, avg_u))
    print("KERNEL_OK")
</pallas_src>

<mosaic_0001>
module attributes {stable_mosaic.version = 11 : i64} {
  func.func @_ema_kernel(%arg0: i32, %arg1: memref<1xf32, #tpu.memory_space<smem>>, %arg2: memref<8x128xf32, #tpu.memory_space<vmem>>, %arg3: memref<8x128xf32, #tpu.memory_space<vmem>>, %arg4: memref<8x128xf32, #tpu.memory_space<vmem>>, %arg5: memref<8x128xf32, #tpu.memory_space<vmem>>) attributes {dimension_semantics = [#tpu.dimension_semantics<parallel>], iteration_bounds = array<i64: 2>, scalar_prefetch = 0 : i64, scratch_operands = 0 : i64, tpu.core_type = #tpu.core_type<tc>, window_params = [{transform_indices = @transform_0, window_bounds = array<i64: 1>}, {transform_indices = @transform_1, window_bounds = array<i64: 8, 128>}, {transform_indices = @transform_2, window_bounds = array<i64: 8, 128>}, {transform_indices = @transform_3, window_bounds = array<i64: 8, 128>}, {transform_indices = @transform_4, window_bounds = array<i64: 8, 128>}]} {
    %c0 = arith.constant 0 : index
    %0 = memref.load %arg1[%c0] : memref<1xf32, #tpu.memory_space<smem>>
    %c0_0 = arith.constant 0 : index
    %c0_1 = arith.constant 0 : index
    %1 = vector.load %arg2[%c0_0, %c0_1] : memref<8x128xf32, #tpu.memory_space<vmem>>, vector<8x128xf32>
    %c0_2 = arith.constant 0 : index
    %c0_3 = arith.constant 0 : index
    %2 = vector.load %arg3[%c0_2, %c0_3] : memref<8x128xf32, #tpu.memory_space<vmem>>, vector<8x128xf32>
    %3 = arith.subf %1, %2 : vector<8x128xf32>
    %cst = arith.constant 0.00999999977 : f32
    %4 = vector.broadcast %cst : f32 to vector<8x128xf32>
    %5 = arith.mulf %3, %4 : vector<8x128xf32>
    %6 = arith.subf %1, %5 : vector<8x128xf32>
    %c0_4 = arith.constant 0 : index
    %c0_5 = arith.constant 0 : index
    %7 = vector.load %arg4[%c0_4, %c0_5] : memref<8x128xf32, #tpu.memory_space<vmem>>, vector<8x128xf32>
    tpu.vector_store %arg4[%c0_4, %c0_5], %6 {strides = array<i32>} : memref<8x128xf32, #tpu.memory_space<vmem>>, vector<8x128xf32>,
    %8 = vector.broadcast %0 : f32 to vector<8x128xf32>
    %9 = arith.mulf %6, %8 : vector<8x128xf32>
    %c0_6 = arith.constant 0 : index
    %c0_7 = arith.constant 0 : index
    %10 = vector.load %arg5[%c0_6, %c0_7] : memref<8x128xf32, #tpu.memory_space<vmem>>, vector<8x128xf32>
    tpu.vector_store %arg5[%c0_6, %c0_7], %9 {strides = array<i32>} : memref<8x128xf32, #tpu.memory_space<vmem>>, vector<8x128xf32>,
    return
  }
  func.func @transform_0(%arg0: i32) -> i32 {
    %c0_i32 = arith.constant 0 : i32
    %c0_i32_0 = arith.constant 0 : i32
    return %c0_i32 : i32
  }
  func.func @transform_1(%arg0: i32) -> (i32, i32) {
    %c0_i32 = arith.constant 0 : i32
    %c0_i32_0 = arith.constant 0 : i32
    return %arg0, %c0_i32 : i32, i32
  }
  func.func @transform_2(%arg0: i32) -> (i32, i32) {
    %c0_i32 = arith.constant 0 : i32
    %c0_i32_0 = arith.constant 0 : i32
    return %arg0, %c0_i32 : i32, i32
  }
  func.func @transform_3(%arg0: i32) -> (i32, i32) {
    %c0_i32 = arith.constant 0 : i32
    %c0_i32_0 = arith.constant 0 : i32
    return %arg0, %c0_i32 : i32, i32
  }
  func.func @transform_4(%arg0: i32) -> (i32, i32) {
    %c0_i32 = arith.constant 0 : i32
    %c0_i32_0 = arith.constant 0 : i32
    return %arg0, %c0_i32 : i32, i32
  }
}

</mosaic_0001>

<llo_original>
// kernel: _ema_step.1
$region0: #{_ema_step.1}
  #allocation0 [shape = 'u32[]', space=smem, size = 0x4, offset = 0x4, fixed_abs, tag = 'smem constant byte address 0x4 - core index']
  #allocation1 [shape = 'u32[144,128]{1,0:T(1,128)}', space=vmem, size = 0x12000, scoped, tag = 'internal scratch']
  #allocation2 [shape = 'f32[1]{0:T(128)S(6)}', space=smem, size = 0x200, scoped, tag = 'scoped memory for _ema_step.1']
  %s0 = inlined_call_operand.<no memory space> [shape: f32[1], index: 0, kind: input, shape index: {}]
  %s1 = inlined_call_operand.vmem [shape: f32[16,128], index: 1, kind: input, shape index: {}, may-alias: {1,3}]
  %s2 = inlined_call_operand.vmem [shape: f32[16,128], index: 2, kind: input, shape index: {}]
  %s3 = inlined_call_operand.vmem [shape: f32[16,128], index: 3, kind: output, shape index: {0}, may-alias: {1,3}]
  %s4 = inlined_call_operand.vmem [shape: f32[16,128], index: 4, kind: output, shape index: {1}]
  %5 = xla_tuple %s3, %s4
  %s6 = sld [smem:[#allocation0]]
  $region53: #{_ema_step.1} parent=0
    _
  %s8 = ssub.s32 1, %s6
  %s9 = scalar_select 0, %s8, %s6
  %10 = sst [smem:[#allocation2]] %s0
  loop: start=0, step=1, limit=4
  $region2: #{_ema_step.1} parent=0 // loop_pre_header
    _
  $region3: #{_ema_step.1} parent=0 // loop_header
    %s12 = sphi 0, %s16
    %p13 = scmp.ge.s32.totalorder %s12, 4
    %s20 = sphi 0, %s20
    %s22 = sphi 0, %s20
    %s23 = sphi 0, %s22
    %s37 = sphi 0, %s23
    %s43 = sphi 0, %s45
    %s46 = sphi 0, %s43
    %s47 = sphi 0, %s46
    %s63 = sphi 0, %s47
    %s69 = sphi 0, %s71
    %s72 = sphi 0, %s69
    %s73 = sphi 0, %s72
    %s89 = sphi 0, %s73
    %s95 = sphi 0, %s97
    %s98 = sphi 0, %s95
    %s99 = sphi 0, %s98
    %s115 = sphi 0, %s99
    %s121 = sphi 0, %s123
    %s124 = sphi 0, %s121
    %s125 = sphi 0, %s124
    %s141 = sphi 0, %s125
  $region4: #{_ema_step.1} parent=0 // loop_header_branch
    %15 = sbr.rel (%p13) target = $region8
  $region5: #{_ema_step.1} parent=0 // loop_body
    %s17 = ssub.s32 %s12, 1
    %s18 = ssub.s32 %s12, 2
    %s19 = sadd.s32 %s12, 1
    %s21 = sadd.s32 %s20, 1
    %p24 = scmp.eq.s32.totalorder %s12, 1
    %p25 = scmp.ne.s32.totalorder %s20, %s22
    %p26 = scmp.eq.s32.totalorder %s12, 0
    %p27 = por %p25, %p26
    %p28 = scmp.ne.s32.totalorder %s20, %s22
    %p29 = scmp.eq.s32.totalorder %s17, 1
    %p30 = por %p28, %p29
    %p31 = scmp.ne.s32.totalorder %s22, %s23
    %p32 = scmp.eq.s32.totalorder %s17, 0
    %p33 = por %p31, %p32
    %p34 = scmp.ne.s32.totalorder %s22, %s23
    %p35 = scmp.eq.s32.totalorder %s18, 1
    %p36 = por %p34, %p35
    %p38 = scmp.ne.s32.totalorder %s23, %s37
    %p39 = scmp.eq.s32.totalorder %s18, 0
    %p40 = por %p38, %p39
    %s41 = ssub.s32 %s12, %s19
    %p42 = scmp.eq.s32.totalorder %s41, 0
    %s44 = sadd.s32 %s43, 1
    %s45 = scalar_select %p42, %s43, %s44
    %p48 = pneg %p42
    %p49 = scmp.eq.s32.totalorder %s12, 1
    %p50 = por %p48, %p49
    %p51 = scmp.ne.s32.totalorder %s43, %s46
    %p52 = scmp.eq.s32.totalorder %s12, 0
    %p53 = por %p51, %p52
    %p54 = scmp.ne.s32.totalorder %s43, %s46
    %p55 = scmp.eq.s32.totalorder %s17, 1
    %p56 = por %p54, %p55
    %p57 = scmp.ne.s32.totalorder %s46, %s47
    %p58 = scmp.eq.s32.totalorder %s17, 0
    %p59 = por %p57, %p58
    %p60 = scmp.ne.s32.totalorder %s46, %s47
    %p61 = scmp.eq.s32.totalorder %s18, 1
    %p62 = por %p60, %p61
    %p64 = scmp.ne.s32.totalorder %s47, %s63
    %p65 = scmp.eq.s32.totalorder %s18, 0
    %p66 = por %p64, %p65
    %s67 = ssub.s32 %s12, %s19
    %p68 = scmp.eq.s32.totalorder %s67, 0
    %s70 = sadd.s32 %s69, 1
    %s71 = scalar_select %p68, %s69, %s70
    %p74 = pneg %p68
    %p75 = scmp.eq.s32.totalorder %s12, 1
    %p76 = por %p74, %p75
    %p77 = scmp.ne.s32.totalorder %s69, %s72
    %p78 = scmp.eq.s32.totalorder %s12, 0
    %p79 = por %p77, %p78
    %p80 = scmp.ne.s32.totalorder %s69, %s72
    %p81 = scmp.eq.s32.totalorder %s17, 1
    %p82 = por %p80, %p81
    %p83 = scmp.ne.s32.totalorder %s72, %s73
    %p84 = scmp.eq.s32.totalorder %s17, 0
    %p85 = por %p83, %p84
    %p86 = scmp.ne.s32.totalorder %s72, %s73
    %p87 = scmp.eq.s32.totalorder %s18, 1
    %p88 = por %p86, %p87
    %p90 = scmp.ne.s32.totalorder %s73, %s89
    %p91 = scmp.eq.s32.totalorder %s18, 0
    %p92 = por %p90, %p91
    %s93 = ssub.s32 %s12, %s19
    %p94 = scmp.eq.s32.totalorder %s93, 0
    %s96 = sadd.s32 %s95, 1
    %s97 = scalar_select %p94, %s95, %s96
    %p100 = pneg %p94
    %p101 = scmp.eq.s32.totalorder %s12, 1
    %p102 = por %p100, %p101
    %p103 = scmp.ne.s32.totalorder %s95, %s98
    %p104 = scmp.eq.s32.totalorder %s12, 0
    %p105 = por %p103, %p104
    %p106 = scmp.ne.s32.totalorder %s95, %s98
    %p107 = scmp.eq.s32.totalorder %s17, 1
    %p108 = por %p106, %p107
    %p109 = scmp.ne.s32.totalorder %s98, %s99
    %p110 = scmp.eq.s32.totalorder %s17, 0
    %p111 = por %p109, %p110
    %p112 = scmp.ne.s32.totalorder %s98, %s99
    %p113 = scmp.eq.s32.totalorder %s18, 1
    %p114 = por %p112, %p113
    %p116 = scmp.ne.s32.totalorder %s99, %s115
    %p117 = scmp.eq.s32.totalorder %s18, 0
    %p118 = por %p116, %p117
    %s119 = ssub.s32 %s12, %s19
    %p120 = scmp.eq.s32.totalorder %s119, 0
    %s122 = sadd.s32 %s121, 1
    %s123 = scalar_select %p120, %s121, %s122
    %p126 = pneg %p120
    %p127 = scmp.eq.s32.totalorder %s12, 1
    %p128 = por %p126, %p127
    %p129 = scmp.ne.s32.totalorder %s121, %s124
    %p130 = scmp.eq.s32.totalorder %s12, 0
    %p131 = por %p129, %p130
    %p132 = scmp.ne.s32.totalorder %s121, %s124
    %p133 = scmp.eq.s32.totalorder %s17, 1
    %p134 = por %p132, %p133
    %p135 = scmp.ne.s32.totalorder %s124, %s125
    %p136 = scmp.eq.s32.totalorder %s17, 0
    %p137 = por %p135, %p136
    %p138 = scmp.ne.s32.totalorder %s124, %s125
    %p139 = scmp.eq.s32.totalorder %s18, 1
    %p140 = por %p138, %p139
    %p142 = scmp.ne.s32.totalorder %s125, %s141
    %p143 = scmp.eq.s32.totalorder %s18, 0
    %p144 = por %p142, %p143
    %p145 = scmp.le.s32.totalorder 1, %s12
    %p146 = scmp.lt.s32.totalorder %s12, 3
    %p147 = pnand %p145, %p146
    %p148 = pneg %p147
    // Predicated region
    $region9: #{_ema_step.1} parent=5 // pred_check
      _
    $region10: #{_ema_step.1} parent=5 // pred_check_branch
      %150 = sbr.rel (%p147) target = $region12
    $region11: #{_ema_step.1} parent=5 // pred_region
      %s151 = ssub.s32 %s12, 1
      // Predicated region
      $region13: #{_ema_step.1} parent=11 // pred_check
        %p152 = pneg %p33
      $region14: #{_ema_step.1} parent=11 // pred_check_branch
        %154 = sbr.rel (%p152) target = $region16
      $region15: #{_ema_step.1} parent=11 // pred_region
        _
      $region16: #{_ema_step.1} parent=11 // pred_fallthru
        _
    $region12: #{_ema_step.1} parent=5 // pred_fallthru
      _
    %p155 = scmp.lt.s32.totalorder %s12, 2
    // Predicated region
    $region17: #{_ema_step.1} parent=5 // pred_check
      %p156 = pneg %p155
    $region18: #{_ema_step.1} parent=5 // pred_check_branch
      %158 = sbr.rel (%p156) target = $region20
    $region19: #{_ema_step.1} parent=5 // pred_region
      // Predicated region
      $region21: #{_ema_step.1} parent=19 // pred_check
        %p159 = pneg %p53
      $region22: #{_ema_step.1} parent=19 // pred_check_branch
        %161 = sbr.rel (%p159) target = $region24
      $region23: #{_ema_step.1} parent=19 // pred_region
        %p162 = scmp.lt.s32.totalorder %s12, 1
        %s163 = scalar_select %p162, %s12, 1
        %s164 = smul.addr %s163, 8
        %s165 = scalar_lea.vmem %s1, %s164
      $region24: #{_ema_step.1} parent=19 // pred_fallthru
        _
      // Predicated region
      $region25: #{_ema_step.1} parent=19 // pred_check
        %p166 = pneg %p79
      $region26: #{_ema_step.1} parent=19 // pred_check_branch
        %168 = sbr.rel (%p166) target = $region28
      $region27: #{_ema_step.1} parent=19 // pred_region
        %p169 = scmp.lt.s32.totalorder %s12, 1
        %s170 = scalar_select %p169, %s12, 1
        %s171 = smul.addr %s170, 8
        %s172 = scalar_lea.vmem %s2, %s171
      $region28: #{_ema_step.1} parent=19 // pred_fallthru
        _
    $region20: #{_ema_step.1} parent=5 // pred_fallthru
      _
    %p173 = scmp.le.s32.totalorder 1, %s12
    %p174 = scmp.lt.s32.totalorder %s12, 3
    %p175 = pnand %p173, %p174
    %p176 = pneg %p175
    // Predicated region
    $region29: #{_ema_step.1} parent=5 // pred_check
      _
    $region30: #{_ema_step.1} parent=5 // pred_check_branch
      %178 = sbr.rel (%p175) target = $region32
    $region31: #{_ema_step.1} parent=5 // pred_region
      %s179 = ssub.s32 %s12, 1
      %p180 = pneg %p33
      %p181 = pneg %p30
      %p182 = scmp.lt.s32.totalorder %s17, 1
      %s183 = scalar_select %p182, %s17, 1
      %s184 = smul.addr %s183, 8
      %s185 = scalar_lea.vmem %s1, %s184
      %p186 = pneg %p59
      %p187 = pneg %p56
      %p188 = scmp.lt.s32.totalorder %s17, 1
      %s189 = scalar_select %p188, %s17, 1
      %s190 = smul.addr %s189, 8
      %s191 = scalar_lea.vmem %s2, %s190
      %p192 = pneg %p85
      %p193 = pneg %p82
      %p194 = pneg %p111
      %p195 = pneg %p108
      %p196 = scmp.lt.s32.totalorder %s17, 1
      %s197 = scalar_select %p196, %s17, 1
      %s198 = smul.addr %s197, 8
      %s199 = scalar_lea.vmem %s3, %s198
      %p200 = pneg %p137
      %p201 = pneg %p134
      %p202 = scmp.lt.s32.totalorder %s17, 1
      %s203 = scalar_select %p202, %s17, 1
      %s204 = smul.addr %s203, 8
      %s205 = scalar_lea.vmem %s4, %s204
      %p206 = scmp.lt.s32.totalorder %s17, 1
      %s207 = scalar_select %p206, %s17, 1
      %s208 = smul.addr %s207, 8
      %s209 = scalar_lea.vmem %s1, %s208
      %p210 = scmp.lt.s32.totalorder %s17, 1
      %s211 = scalar_select %p210, %s17, 1
      %s212 = smul.addr %s211, 8
      %s213 = scalar_lea.vmem %s2, %s212
      %p214 = scmp.lt.s32.totalorder %s17, 1
      %s215 = scalar_select %p214, %s17, 1
      %s216 = smul.addr %s215, 8
      %s217 = scalar_lea.vmem %s3, %s216
      %p218 = scmp.lt.s32.totalorder %s17, 1
      %s219 = scalar_select %p218, %s17, 1
      %s220 = smul.addr %s219, 8
      %s221 = scalar_lea.vmem %s4, %s220
      %s222 = sld [smem:[#allocation2]]
      %v223 = vld [vmem:[%s209] sm:$0xff]
      %v224 = vld [vmem:[%s213] sm:$0xff]
      %v225 = vsub.f32 %v223, %v224
      %v226 = vmul.f32 %v225, 0.01
      %v227 = vsub.f32 %v223, %v226
      %228 = vst [vmem:[%s217] sm:$0xff] %v227
      %v229 = vstv %s222
      %v230 = vmul.f32 %v227, %v229
      %231 = vst [vmem:[%s221] sm:$0xff] %v230
      %p232 = scmp.lt.s32.totalorder %s17, 1
      %s233 = scalar_select %p232, %s17, 1
      %s234 = smul.addr %s233, 8
      %s235 = scalar_lea.vmem %s3, %s234
      %p236 = scmp.lt.s32.totalorder %s17, 1
      %s237 = scalar_select %p236, %s17, 1
      %s238 = smul.addr %s237, 8
      %s239 = scalar_lea.vmem %s4, %s238
      // Predicated region
      $region33: #{_ema_step.1} parent=31 // pred_check
        %p240 = pneg %p108
      $region34: #{_ema_step.1} parent=31 // pred_check_branch
        %242 = sbr.rel (%p240) target = $region36
      $region35: #{_ema_step.1} parent=31 // pred_region
        _
      $region36: #{_ema_step.1} parent=31 // pred_fallthru
        _
      // Predicated region
      $region37: #{_ema_step.1} parent=31 // pred_check
        %p243 = pneg %p134
      $region38: #{_ema_step.1} parent=31 // pred_check_branch
        %245 = sbr.rel (%p243) target = $region40
      $region39: #{_ema_step.1} parent=31 // pred_region
        _
      $region40: #{_ema_step.1} parent=31 // pred_fallthru
        _
    $region32: #{_ema_step.1} parent=5 // pred_fallthru
      _
    %p246 = scmp.le.s32.totalorder 2, %s12
    // Predicated region
    $region41: #{_ema_step.1} parent=5 // pred_check
      %p247 = pneg %p246
    $region42: #{_ema_step.1} parent=5 // pred_check_branch
      %249 = sbr.rel (%p247) target = $region44
    $region43: #{_ema_step.1} parent=5 // pred_region
      %s250 = ssub.s32 %s12, 2
      // Predicated region
      $region45: #{_ema_step.1} parent=43 // pred_check
        %p251 = pneg %p114
      $region46: #{_ema_step.1} parent=43 // pred_check_branch
        %253 = sbr.rel (%p251) target = $region48
      $region47: #{_ema_step.1} parent=43 // pred_region
        %p254 = scmp.lt.s32.totalorder %s18, 1
        %s255 = scalar_select %p254, %s18, 1
        %s256 = smul.addr %s255, 8
        %s257 = scalar_lea.vmem %s3, %s256
      $region48: #{_ema_step.1} parent=43 // pred_fallthru
        _
      // Predicated region
      $region49: #{_ema_step.1} parent=43 // pred_check
        %p258 = pneg %p140
      $region50: #{_ema_step.1} parent=43 // pred_check_branch
        %260 = sbr.rel (%p258) target = $region52
      $region51: #{_ema_step.1} parent=43 // pred_region
        %p261 = scmp.lt.s32.totalorder %s18, 1
        %s262 = scalar_select %p261, %s18, 1
        %s263 = smul.addr %s262, 8
        %s264 = scalar_lea.vmem %s4, %s263
      $region52: #{_ema_step.1} parent=43 // pred_fallthru
        _
    $region44: #{_ema_step.1} parent=5 // pred_fallthru
      _
  $region6: #{_ema_step.1} parent=0 // loop_footer
    %s16 = sadd.s32 1, %s12
  $region7: #{_ema_step.1} parent=0 // loop_footer_branch
    %11 = sbr.rel target = $region3
  $region8: #{_ema_step.1} parent=0 // loop_exit
    _

</llo_original>
